<compile_context>
chip_gen: v5e
topology: v5e:2x2
jax: 0.10.0
libtpu: 0.0.40
codegen_flags: <defaults>
</compile_context>

<pallas_src>
import functools

import jax
import jax.numpy as jnp
from jax import lax
from jax.experimental import pallas as pl
from jax.experimental.pallas import tpu as pltpu


# ----------------------- tiled, stacked linear kernel -----------------------

def _stacked_linear_kernel(x_ref, w_ref, b_ref, o_ref, acc_ref):
    # Grid: (P, Mt, Nt, Kt); reduction axis (K) is last.
    k = pl.program_id(3)

    @pl.when(k == 0)
    def _():
        acc_ref[...] = jnp.zeros_like(acc_ref)

    acc_ref[...] += jnp.dot(
        x_ref[...], w_ref[...], preferred_element_type=jnp.float32
    )

    @pl.when(k == pl.num_programs(3) - 1)
    def _():
        o_ref[...] = (acc_ref[...] + b_ref[...]).astype(o_ref.dtype)


def _fit_tile(dim, target):
    """Use the target tile if it divides the dim, else fall back to the full dim
    (a full-extent block is always a legal TPU block shape)."""
    return target if dim % target == 0 else dim


def stacked_linear(x, w, b, *, tm=256, tn=256, tk=256):
    """y[p] = x[p] @ w[p] + b[p] for p in range(P), as one tiled pallas_call.

    x: (P, M, K)   w: (P, K, N)   b: (P, 1, N)   ->   (P, M, N) float32
    """
    P, M, K = x.shape
    _, _, N = w.shape
    tm = _fit_tile(M, tm)
    tn = _fit_tile(N, tn)
    tk = _fit_tile(K, tk)
    grid = (P, M // tm, N // tn, K // tk)

    return pl.pallas_call(
        _stacked_linear_kernel,
        out_shape=jax.ShapeDtypeStruct((P, M, N), jnp.float32),
        grid_spec=pltpu.PrefetchScalarGridSpec(
            num_scalar_prefetch=0,
            grid=grid,
            in_specs=[
                pl.BlockSpec((None, tm, tk), lambda p, i, j, k: (p, i, k)),
                pl.BlockSpec((None, tk, tn), lambda p, i, j, k: (p, k, j)),
                pl.BlockSpec((None, 1, tn), lambda p, i, j, k: (p, 0, j)),
            ],
            out_specs=pl.BlockSpec((None, tm, tn), lambda p, i, j, k: (p, i, j)),
            scratch_shapes=[pltpu.VMEM((tm, tn), jnp.float32)],
        ),
        compiler_params=pltpu.CompilerParams(
            dimension_semantics=("parallel", "parallel", "parallel", "arbitrary"),
            # Tiles (256x256 f32, double-buffered) stay well under v7x's 64 MiB VMEM.
            vmem_limit_bytes=32 * 1024 * 1024,
        ),
    )(x, w, b)


# --------------------------- attention kernel --------------------------------

def _mha_kernel(qkv_ref, o_ref, aw_ref, *, num_heads, head_dim):
    # qkv_ref: (3, S, D)  — [q; k; v] projections for one batch, all heads.
    # o_ref  : (S, D)     — merged-head output (lane-dense last dim).
    # aw_ref : (H, S, S)  — attention weights (module output).
    scale = 1.0 / jnp.sqrt(jnp.float32(head_dim))
    q = qkv_ref[0]
    k = qkv_ref[1]
    v = qkv_ref[2]

    outs = []
    for h in range(num_heads):  # static unroll; one grid step covers all heads
        lo = h * head_dim
        hi = lo + head_dim
        qh = q[:, lo:hi]
        kh = k[:, lo:hi]
        vh = v[:, lo:hi]

        # scores: contract last dims of Q and K directly (no explicit transpose)
        s = lax.dot_general(
            qh, kh,
            dimension_numbers=(((1,), (1,)), ((), ())),
            preferred_element_type=jnp.float32,
        ) * scale

        # numerically-stable softmax; reciprocal goes to the EUP slot
        s = s - jnp.max(s, axis=-1, keepdims=True)
        p = jnp.exp(s)
        p = p * pl.reciprocal(jnp.sum(p, axis=-1, keepdims=True), approx=True)

        aw_ref[h] = p
        outs.append(jnp.dot(p, vh, preferred_element_type=jnp.float32))

    # single lane-dense store of the merged-head output (last dim = D)
    o_ref[...] = jnp.concatenate(outs, axis=-1)


def attention(qkv, num_heads):
    """qkv: (3, B, S, D) -> (out (B, S, D), attn_weights (B, H, S, S))."""
    _, B, S, D = qkv.shape
    head_dim = D // num_heads
    kernel = functools.partial(_mha_kernel, num_heads=num_heads, head_dim=head_dim)

    out, attn_w = pl.pallas_call(
        kernel,
        out_shape=(
            jax.ShapeDtypeStruct((B, S, D), jnp.float32),
            jax.ShapeDtypeStruct((B, num_heads, S, S), jnp.float32),
        ),
        grid=(B,),
        in_specs=[pl.BlockSpec((3, None, S, D), lambda b: (0, b, 0, 0))],
        out_specs=(
            pl.BlockSpec((None, S, D), lambda b: (b, 0, 0)),
            pl.BlockSpec((None, num_heads, S, S), lambda b: (b, 0, 0, 0)),
        ),
        compiler_params=pltpu.CompilerParams(
            dimension_semantics=("parallel",),
            vmem_limit_bytes=32 * 1024 * 1024,
        ),
    )(qkv)
    return out, attn_w


# ---------------------------- module wrapper --------------------------------

def multihead_self_attention(params, query, key, value, num_heads):
    assert query.shape == key.shape == value.shape, (
        "fused QKV path assumes self-attention-style shapes (Sq == Sk == Sv)"
    )
    B, S, D = query.shape

    # Fused, tiled Q/K/V projection: one pallas_call for all three matmuls.
    # (PyTorch Linear: y = x @ W^T + b; weights stored (out, in).)
    x_stack = jnp.stack(
        [query.reshape(B * S, D), key.reshape(B * S, D), value.reshape(B * S, D)],
        axis=0,
    )
    w_stack = jnp.stack([params["wq"].T, params["wk"].T, params["wv"].T], axis=0)
    b_stack = jnp.stack([params["bq"], params["bk"], params["bv"]], axis=0)
    b_stack = b_stack.reshape(3, 1, D)

    qkv = stacked_linear(x_stack, w_stack, b_stack)      # (3, B*S, D)
    qkv = qkv.reshape(3, B, S, D)                        # row-major view, no transpose

    # Attention over all heads per batch; output already in (B, S, D) layout.
    out, attn_w = attention(qkv, num_heads)

    # Output projection (same tiled kernel, stack of 1).
    out = stacked_linear(
        out.reshape(1, B * S, D),
        params["wo"].T.reshape(1, D, D),
        params["bo"].reshape(1, 1, D),
    )[0].reshape(B, S, D)
    return out, attn_w


# ------------------------------ reference -----------------------------------

def reference(params, query, key, value, num_heads):
    B, Sq, D = query.shape
    Sk = key.shape[1]
    hd = D // num_heads
    q = query @ params["wq"].T + params["bq"]
    k = key @ params["wk"].T + params["bk"]
    v = value @ params["wv"].T + params["bv"]
    q = q.reshape(B, Sq, num_heads, hd).transpose(0, 2, 1, 3)
    k = k.reshape(B, Sk, num_heads, hd).transpose(0, 2, 1, 3)
    v = v.reshape(B, Sk, num_heads, hd).transpose(0, 2, 1, 3)
    s = jnp.einsum("bhqd,bhkd->bhqk", q, k) / jnp.sqrt(jnp.float32(hd))
    p = jax.nn.softmax(s, axis=-1)
    o = jnp.einsum("bhqk,bhkd->bhqd", p, v)
    o = o.transpose(0, 2, 1, 3).reshape(B, Sq, D)
    o = o @ params["wo"].T + params["bo"]
    return o, p


# -------------------------------- main ---------------------------------------

if __name__ == "__main__":
    B, S, D, H = 2, 8, 32, 4  # batch, seq, input_dim, num_heads

    key0 = jax.random.PRNGKey(0)
    ks = jax.random.split(key0, 16)

    def init_w(k):
        return jax.random.normal(k, (D, D), jnp.float32) * 0.1

    def init_b(k):
        return jax.random.normal(k, (D,), jnp.float32) * 0.01

    params = {
        "wq": init_w(ks[0]), "bq": init_b(ks[1]),
        "wk": init_w(ks[2]), "bk": init_b(ks[3]),
        "wv": init_w(ks[4]), "bv": init_b(ks[5]),
        "wo": init_w(ks[6]), "bo": init_b(ks[7]),
    }

    query = jax.random.normal(ks[8], (B, S, D), jnp.float32)
    key_in = jax.random.normal(ks[9], (B, S, D), jnp.float32)
    value = jax.random.normal(ks[10], (B, S, D), jnp.float32)

    out, attn_w = multihead_self_attention(params, query, key_in, value, H)
    out = jax.block_until_ready(out)
    attn_w = jax.block_until_ready(attn_w)

    ref_out, ref_attn = reference(params, query, key_in, value, H)
    assert out.shape == (B, S, D)
    assert attn_w.shape == (B, H, S, S)
    # tolerance accounts for the EUP approximate reciprocal in the softmax denom
    assert jnp.allclose(out, ref_out, atol=2e-3, rtol=2e-3)
    assert jnp.allclose(attn_w, ref_attn, atol=2e-3, rtol=2e-3)

    print("KERNEL_OK")
</pallas_src>

<mosaic_0001>
module attributes {stable_mosaic.version = 11 : i64} {
  func.func @_stacked_linear_kernel(%arg0: i32, %arg1: i32, %arg2: i32, %arg3: i32, %arg4: memref<1x16x32xf32, #tpu.memory_space<vmem>>, %arg5: memref<1x32x32xf32, #tpu.memory_space<vmem>>, %arg6: memref<1x1x32xf32, #tpu.memory_space<vmem>>, %arg7: memref<1x16x32xf32, #tpu.memory_space<vmem>>, %arg8: memref<16x32xf32, #tpu.memory_space<vmem>>) attributes {dimension_semantics = [#tpu.dimension_semantics<parallel>, #tpu.dimension_semantics<parallel>, #tpu.dimension_semantics<parallel>, #tpu.dimension_semantics<arbitrary>], iteration_bounds = array<i64: 3, 1, 1, 1>, scalar_prefetch = 0 : i64, scratch_operands = 1 : i64, tpu.core_type = #tpu.core_type<tc>, window_params = [{transform_indices = @transform_0, window_bounds = array<i64: 1, 16, 32>}, {transform_indices = @transform_1, window_bounds = array<i64: 1, 32, 32>}, {transform_indices = @transform_2, window_bounds = array<i64: 1, 1, 32>}, {transform_indices = @transform_3, window_bounds = array<i64: 1, 16, 32>}]} {
    %c0_i32 = arith.constant 0 : i32
    %0 = arith.cmpi eq, %arg3, %c0_i32 : i32
    %1 = arith.extui %0 : i1 to i32
    %c0_i32_0 = arith.constant 0 : i32
    %2 = arith.cmpi ne, %1, %c0_i32_0 : i32
    scf.if %2 {
      %cst_12 = arith.constant 0.000000e+00 : f32
      %14 = vector.broadcast %cst_12 : f32 to vector<16x32xf32>
      %c0_13 = arith.constant 0 : index
      %c0_14 = arith.constant 0 : index
      %15 = vector.load %arg8[%c0_13, %c0_14] : memref<16x32xf32, #tpu.memory_space<vmem>>, vector<16x32xf32>
      tpu.vector_store %arg8[%c0_13, %c0_14], %14 {strides = array<i32>} : memref<16x32xf32, #tpu.memory_space<vmem>>, vector<16x32xf32>,
    } else {
    }
    %c0 = arith.constant 0 : index
    %c0_1 = arith.constant 0 : index
    %3 = vector.load %arg8[%c0, %c0_1] : memref<16x32xf32, #tpu.memory_space<vmem>>, vector<16x32xf32>
    %c0_2 = arith.constant 0 : index
    %c0_3 = arith.constant 0 : index
    %c0_4 = arith.constant 0 : index
    %4 = vector.load %arg4[%c0_2, %c0_3, %c0_4] : memref<1x16x32xf32, #tpu.memory_space<vmem>>, vector<1x16x32xf32>
    %5 = vector.shape_cast %4 : vector<1x16x32xf32> to vector<16x32xf32>
    %c0_5 = arith.constant 0 : index
    %c0_6 = arith.constant 0 : index
    %c0_7 = arith.constant 0 : index
    %6 = vector.load %arg5[%c0_5, %c0_6, %c0_7] : memref<1x32x32xf32, #tpu.memory_space<vmem>>, vector<1x32x32xf32>
    %7 = vector.shape_cast %6 : vector<1x32x32xf32> to vector<32x32xf32>
    %cst = arith.constant dense<0.000000e+00> : vector<16x32xf32>
    %8 = tpu.matmul %5, %7, %cst {dimension_numbers = #tpu.dot_dimension_numbers<[1], [0], [0], [1], [0, 0, 1, 1], [], []>} : vector<16x32xf32>, vector<32x32xf32>, vector<16x32xf32> -> vector<16x32xf32>
    %9 = arith.addf %3, %8 : vector<16x32xf32>
    %c0_8 = arith.constant 0 : index
    %c0_9 = arith.constant 0 : index
    %10 = vector.load %arg8[%c0_8, %c0_9] : memref<16x32xf32, #tpu.memory_space<vmem>>, vector<16x32xf32>
    tpu.vector_store %arg8[%c0_8, %c0_9], %9 {strides = array<i32>} : memref<16x32xf32, #tpu.memory_space<vmem>>, vector<16x32xf32>,
    %c0_i32_10 = arith.constant 0 : i32
    %11 = arith.cmpi eq, %arg3, %c0_i32_10 : i32
    %12 = arith.extui %11 : i1 to i32
    %c0_i32_11 = arith.constant 0 : i32
    %13 = arith.cmpi ne, %12, %c0_i32_11 : i32
    scf.if %13 {
      %c0_12 = arith.constant 0 : index
      %c0_13 = arith.constant 0 : index
      %14 = vector.load %arg8[%c0_12, %c0_13] : memref<16x32xf32, #tpu.memory_space<vmem>>, vector<16x32xf32>
      %c0_14 = arith.constant 0 : index
      %c0_15 = arith.constant 0 : index
      %c0_16 = arith.constant 0 : index
      %15 = vector.load %arg6[%c0_14, %c0_15, %c0_16] : memref<1x1x32xf32, #tpu.memory_space<vmem>>, vector<1x1x32xf32>
      %16 = vector.shape_cast %15 : vector<1x1x32xf32> to vector<1x32xf32>
      %17 = vector.broadcast %16 : vector<1x32xf32> to vector<16x32xf32>
      %18 = arith.addf %14, %17 : vector<16x32xf32>
      %c0_17 = arith.constant 0 : index
      %c0_18 = arith.constant 0 : index
      %c0_19 = arith.constant 0 : index
      %19 = vector.load %arg7[%c0_17, %c0_18, %c0_19] : memref<1x16x32xf32, #tpu.memory_space<vmem>>, vector<1x16x32xf32>
      %20 = vector.shape_cast %19 : vector<1x16x32xf32> to vector<16x32xf32>
      %21 = vector.shape_cast %18 : vector<16x32xf32> to vector<1x16x32xf32>
      tpu.vector_store %arg7[%c0_17, %c0_18, %c0_19], %21 {strides = array<i32>} : memref<1x16x32xf32, #tpu.memory_space<vmem>>, vector<1x16x32xf32>,
    } else {
    }
    return
  }
  func.func @transform_0(%arg0: i32, %arg1: i32, %arg2: i32, %arg3: i32) -> (i32, i32, i32) {
    %c0_i32 = arith.constant 0 : i32
    return %arg0, %arg1, %arg3 : i32, i32, i32
  }
  func.func @transform_1(%arg0: i32, %arg1: i32, %arg2: i32, %arg3: i32) -> (i32, i32, i32) {
    %c0_i32 = arith.constant 0 : i32
    return %arg0, %arg3, %arg2 : i32, i32, i32
  }
  func.func @transform_2(%arg0: i32, %arg1: i32, %arg2: i32, %arg3: i32) -> (i32, i32, i32) {
    %c0_i32 = arith.constant 0 : i32
    %c0_i32_0 = arith.constant 0 : i32
    return %arg0, %c0_i32, %arg2 : i32, i32, i32
  }
  func.func @transform_3(%arg0: i32, %arg1: i32, %arg2: i32, %arg3: i32) -> (i32, i32, i32) {
    %c0_i32 = arith.constant 0 : i32
    return %arg0, %arg1, %arg2 : i32, i32, i32
  }
}

</mosaic_0001>

<llo_original>
// kernel: tpu_custom_call.1
$region0: #{tpu_custom_call.1}
  #allocation0 [shape = 'u32[]', space=smem, size = 0x4, offset = 0x4, fixed_abs, tag = 'smem constant byte address 0x4 - core index']
  #allocation1 [shape = 'u32[72,128]{1,0:T(1,128)}', space=vmem, size = 0x9000, scoped, tag = 'internal scratch']
  #allocation2 [shape = 'f32[16,32]{1,0:T(8,128)}', space=vmem, size = 0x2000, scoped, tag = 'scratch operand']
  %s0 = inlined_call_operand.hbm [shape: f32[3,16,32], index: 0, kind: input, shape index: {}]
  %s1 = inlined_call_operand.hbm [shape: f32[3,32,32], index: 1, kind: input, shape index: {}]
  %s2 = inlined_call_operand.hbm [shape: f32[3,1,32], index: 2, kind: input, shape index: {}]
  %s3 = inlined_call_operand.hbm [shape: f32[3,16,32], index: 3, kind: output, shape index: {}]
  %s4 = sld [smem:[#allocation0]]
  $region65: #{tpu_custom_call.1} parent=0
    _
  %s6 = ssub.s32 1, %s4
  %s7 = scalar_select 0, %s6, %s4
  $region1: #{tpu_custom_call.1} parent=0
    #allocation3 [shape = 'u8[16384]{0}', space=vmem, size = 0x4000, scoped, tag = 'input window, operand 0']
    #allocation4 [shape = 's32[2]{0}', space=sflag, size = 0x8, scoped, tag = 'scoped memory for tpu_custom_call.1']
    #allocation5 [shape = 's32[2]{0}', space=sflag, size = 0x8, scoped, tag = 'scoped memory for tpu_custom_call.1']
    #allocation6 [shape = 'u8[32768]{0}', space=vmem, size = 0x8000, scoped, tag = 'input window, operand 1']
    #allocation7 [shape = 's32[2]{0}', space=sflag, size = 0x8, scoped, tag = 'scoped memory for tpu_custom_call.1']
    #allocation8 [shape = 'u8[1024]{0}', space=vmem, size = 0x400, scoped, tag = 'input window, operand 2']
    #allocation9 [shape = 'u8[16384]{0}', space=vmem, size = 0x4000, scoped, tag = 'output window, operand 0']
    %8 = vsyncpa [#allocation4], 0
    %s9 = scalar_lea.sflag [#allocation4], 1
    %10 = vsyncpa %s9, 0
    %11 = vsyncpa [#allocation7], 0
    %s12 = scalar_lea.sflag [#allocation7], 1
    %13 = vsyncpa %s12, 0
    %14 = vsyncpa [#allocation5], 0
    %s15 = scalar_lea.sflag [#allocation5], 1
    %16 = vsyncpa %s15, 0
    loop: start=0, step=1, limit=5
    $region2: #{tpu_custom_call.1} parent=1 // loop_pre_header
      _
    $region3: #{tpu_custom_call.1} parent=1 // loop_header
      %s18 = sphi 0, %s22
      %p19 = scmp.ge.s32.totalorder %s18, 5
      %s25 = sphi 0, %s51
      %s26 = sphi 0, %s47
      %s27 = sphi 0, %s43
      %s28 = sphi 0, %s39
      %s29 = sphi 0, %s25
      %s30 = sphi 0, %s26
      %s31 = sphi 0, %s27
      %s32 = sphi 0, %s28
      %s33 = sphi 0, %s29
      %s34 = sphi 0, %s30
      %s35 = sphi 0, %s31
      %s36 = sphi 0, %s32
      %s58 = sphi 0, %s60
      %s61 = sphi 0, %s58
      %s62 = sphi 0, %s61
      %s78 = sphi 0, %s62
      %s88 = sphi 0, %s90
      %s91 = sphi 0, %s88
      %s92 = sphi 0, %s91
      %s108 = sphi 0, %s92
      %s116 = sphi 0, %s118
      %s119 = sphi 0, %s116
      %s120 = sphi 0, %s119
      %s136 = sphi 0, %s120
      %s146 = sphi 0, %s148
      %s149 = sphi 0, %s146
      %s150 = sphi 0, %s149
      %s166 = sphi 0, %s150
    $region4: #{tpu_custom_call.1} parent=1 // loop_header_branch
      %21 = sbr.rel (%p19) target = $region8
    $region5: #{tpu_custom_call.1} parent=1 // loop_body
      %s23 = ssub.s32 %s18, 1
      %s24 = ssub.s32 %s18, 2
      %s37 = sadd.s32 1, %s28
      %p38 = scmp.ge.s32.totalorder %s37, 1
      %s39 = scalar_select %p38, 0, %s37
      %s40 = sadd.s32 1, %s27
      %s41 = scalar_select %p38, %s40, %s27
      %p42 = scmp.ge.s32.totalorder %s41, 1
      %s43 = scalar_select %p42, 0, %s41
      %s44 = sadd.s32 1, %s26
      %s45 = scalar_select %p42, %s44, %s26
      %p46 = scmp.ge.s32.totalorder %s45, 1
      %s47 = scalar_select %p46, 0, %s45
      %s48 = sadd.s32 1, %s25
      %s49 = scalar_select %p46, %s48, %s25
      %p50 = scmp.ge.s32.totalorder %s49, 3
      %s51 = scalar_select %p50, 0, %s49
      %s52 = ssub.s32 %s25, %s51
      %s53 = ssub.s32 %s26, %s47
      %s54 = sor.u32 %s52, %s53
      %s55 = ssub.s32 %s28, %s39
      %s56 = sor.u32 %s54, %s55
      %p57 = scmp.eq.s32.totalorder %s56, 0
      %s59 = sadd.s32 %s58, 1
      %s60 = scalar_select %p57, %s58, %s59
      %p63 = pneg %p57
      %p64 = scmp.eq.s32.totalorder %s18, 2
      %p65 = por %p63, %p64
      %p66 = scmp.ne.s32.totalorder %s58, %s61
      %p67 = scmp.eq.s32.totalorder %s18, 0
      %p68 = por %p66, %p67
      %p69 = scmp.ne.s32.totalorder %s58, %s61
      %p70 = scmp.eq.s32.totalorder %s23, 2
      %p71 = por %p69, %p70
      %p72 = scmp.ne.s32.totalorder %s61, %s62
      %p73 = scmp.eq.s32.totalorder %s23, 0
      %p74 = por %p72, %p73
      %p75 = scmp.ne.s32.totalorder %s61, %s62
      %p76 = scmp.eq.s32.totalorder %s24, 2
      %p77 = por %p75, %p76
      %p79 = scmp.ne.s32.totalorder %s62, %s78
      %p80 = scmp.eq.s32.totalorder %s24, 0
      %p81 = por %p79, %p80
      %s82 = ssub.s32 %s25, %s51
      %s83 = ssub.s32 %s28, %s39
      %s84 = sor.u32 %s82, %s83
      %s85 = ssub.s32 %s27, %s43
      %s86 = sor.u32 %s84, %s85
      %p87 = scmp.eq.s32.totalorder %s86, 0
      %s89 = sadd.s32 %s88, 1
      %s90 = scalar_select %p87, %s88, %s89
      %p93 = pneg %p87
      %p94 = scmp.eq.s32.totalorder %s18, 2
      %p95 = por %p93, %p94
      %p96 = scmp.ne.s32.totalorder %s88, %s91
      %p97 = scmp.eq.s32.totalorder %s18, 0
      %p98 = por %p96, %p97
      %p99 = scmp.ne.s32.totalorder %s88, %s91
      %p100 = scmp.eq.s32.totalorder %s23, 2
      %p101 = por %p99, %p100
      %p102 = scmp.ne.s32.totalorder %s91, %s92
      %p103 = scmp.eq.s32.totalorder %s23, 0
      %p104 = por %p102, %p103
      %p105 = scmp.ne.s32.totalorder %s91, %s92
      %p106 = scmp.eq.s32.totalorder %s24, 2
      %p107 = por %p105, %p106
      %p109 = scmp.ne.s32.totalorder %s92, %s108
      %p110 = scmp.eq.s32.totalorder %s24, 0
      %p111 = por %p109, %p110
      %s112 = ssub.s32 %s25, %s51
      %s113 = ssub.s32 %s27, %s43
      %s114 = sor.u32 %s112, %s113
      %p115 = scmp.eq.s32.totalorder %s114, 0
      %s117 = sadd.s32 %s116, 1
      %s118 = scalar_select %p115, %s116, %s117
      %p121 = pneg %p115
      %p122 = scmp.eq.s32.totalorder %s18, 2
      %p123 = por %p121, %p122
      %p124 = scmp.ne.s32.totalorder %s116, %s119
      %p125 = scmp.eq.s32.totalorder %s18, 0
      %p126 = por %p124, %p125
      %p127 = scmp.ne.s32.totalorder %s116, %s119
      %p128 = scmp.eq.s32.totalorder %s23, 2
      %p129 = por %p127, %p128
      %p130 = scmp.ne.s32.totalorder %s119, %s120
      %p131 = scmp.eq.s32.totalorder %s23, 0
      %p132 = por %p130, %p131
      %p133 = scmp.ne.s32.totalorder %s119, %s120
      %p134 = scmp.eq.s32.totalorder %s24, 2
      %p135 = por %p133, %p134
      %p137 = scmp.ne.s32.totalorder %s120, %s136
      %p138 = scmp.eq.s32.totalorder %s24, 0
      %p139 = por %p137, %p138
      %s140 = ssub.s32 %s25, %s51
      %s141 = ssub.s32 %s26, %s47
      %s142 = sor.u32 %s140, %s141
      %s143 = ssub.s32 %s27, %s43
      %s144 = sor.u32 %s142, %s143
      %p145 = scmp.eq.s32.totalorder %s144, 0
      %s147 = sadd.s32 %s146, 1
      %s148 = scalar_select %p145, %s146, %s147
      %p151 = pneg %p145
      %p152 = scmp.eq.s32.totalorder %s18, 2
      %p153 = por %p151, %p152
      %p154 = scmp.ne.s32.totalorder %s146, %s149
      %p155 = scmp.eq.s32.totalorder %s18, 0
      %p156 = por %p154, %p155
      %p157 = scmp.ne.s32.totalorder %s146, %s149
      %p158 = scmp.eq.s32.totalorder %s23, 2
      %p159 = por %p157, %p158
      %p160 = scmp.ne.s32.totalorder %s149, %s150
      %p161 = scmp.eq.s32.totalorder %s23, 0
      %p162 = por %p160, %p161
      %p163 = scmp.ne.s32.totalorder %s149, %s150
      %p164 = scmp.eq.s32.totalorder %s24, 2
      %p165 = por %p163, %p164
      %p167 = scmp.ne.s32.totalorder %s150, %s166
      %p168 = scmp.eq.s32.totalorder %s24, 0
      %p169 = por %p167, %p168
      %p170 = scmp.le.s32.totalorder 1, %s18
      %p171 = scmp.lt.s32.totalorder %s18, 4
      %p172 = pnand %p170, %p171
      %p173 = pneg %p172
      // Predicated region
      $region9: #{tpu_custom_call.1} parent=5 // pred_check
        _
      $region10: #{tpu_custom_call.1} parent=5 // pred_check_branch
        %175 = sbr.rel (%p172) target = $region12
      $region11: #{tpu_custom_call.1} parent=5 // pred_region
        %s176 = ssub.s32 %s18, 1
      $region12: #{tpu_custom_call.1} parent=5 // pred_fallthru
        _
      %p177 = scmp.lt.s32.totalorder %s18, 3
      // Predicated region
      $region13: #{tpu_custom_call.1} parent=5 // pred_check
        %p178 = pneg %p177
      $region14: #{tpu_custom_call.1} parent=5 // pred_check_branch
        %180 = sbr.rel (%p178) target = $region16
      $region15: #{tpu_custom_call.1} parent=5 // pred_region
        // Predicated region
        $region17: #{tpu_custom_call.1} parent=15 // pred_check
          %p181 = pneg %p68
        $region18: #{tpu_custom_call.1} parent=15 // pred_check_branch
          %183 = sbr.rel (%p181) target = $region20
        $region19: #{tpu_custom_call.1} parent=15 // pred_region
          %s184 = sand.u32 %s58, 1
          %s185 = scalar_lea.sflag [#allocation4], %s184
          %s186 = sand.u32 %s58, 1
          %s187 = smul.addr %s186, 16
          %s188 = scalar_lea.vmem [#allocation3], %s187
          %s189 = smul.u32 2, %s26
          %191 = vsyncadd %s185, 0
          %s192 = sadd.s32 %s28, %s189
          %s193 = smul.addr %s25, 2
          %s194 = sadd.s32 %s192, %s193
          %s195 = smul.addr %s194, 8
          %s196 = scalar_lea.hbm %s0, %s195
          %s197 = sshll.u32 %s196, 4
          %s198 = int_to_ptr.hbm [resolvable:$true] %s197
          %s199 = sshll.u32 %s188, 4
          %s200 = int_to_ptr.vmem [resolvable:$true] %s199
          %205 = dma.hbm_to_vmem [thread:$0]  %s198, 256, %s200, %s185, 128, 128, 8
        $region20: #{tpu_custom_call.1} parent=15 // pred_fallthru
          _
        // Predicated region
        $region21: #{tpu_custom_call.1} parent=15 // pred_check
          %p206 = pneg %p98
        $region22: #{tpu_custom_call.1} parent=15 // pred_check_branch
          %208 = sbr.rel (%p206) target = $region24
        $region23: #{tpu_custom_call.1} parent=15 // pred_region
          %s209 = sand.u32 %s18, 1
          %s210 = scalar_lea.sflag [#allocation7], %s209
          %s211 = sand.u32 %s88, 1
          %s212 = smul.addr %s211, 32
          %s213 = scalar_lea.vmem [#allocation6], %s212
          %s214 = smul.u32 4, %s28
          %216 = vsyncadd %s210, 0
          %s217 = sadd.s32 %s27, %s214
          %s218 = smul.addr %s25, 4
          %s219 = sadd.s32 %s217, %s218
          %s220 = smul.addr %s219, 8
          %s221 = scalar_lea.hbm %s1, %s220
          %s222 = sshll.u32 %s221, 4
          %s223 = int_to_ptr.hbm [resolvable:$true] %s222
          %s224 = sshll.u32 %s213, 4
          %s225 = int_to_ptr.vmem [resolvable:$true] %s224
          %230 = dma.hbm_to_vmem [thread:$0]  %s223, 512, %s225, %s210, 128, 128, 8
        $region24: #{tpu_custom_call.1} parent=15 // pred_fallthru
          _
        // Predicated region
        $region25: #{tpu_custom_call.1} parent=15 // pred_check
          %p231 = pneg %p126
        $region26: #{tpu_custom_call.1} parent=15 // pred_check_branch
          %233 = sbr.rel (%p231) target = $region28
        $region27: #{tpu_custom_call.1} parent=15 // pred_region
          %s234 = sand.u32 %s18, 1
          %s235 = scalar_lea.sflag [#allocation7], %s234
          %s236 = sand.u32 %s116, 1
          %s237 = scalar_lea.vmem [#allocation8], %s236
          %239 = vsyncadd %s235, 0
          %s240 = sadd.s32 %s27, %s25
          %s241 = scalar_lea.hbm %s2, %s240
          %s243 = sshll.u32 %s241, 4
          %s244 = int_to_ptr.hbm [resolvable:$true] %s243
          %s245 = sshll.u32 %s237, 4
          %s246 = int_to_ptr.vmem [resolvable:$true] %s245
          %248 = dma.hbm_to_vmem [thread:$0]  %s244, 16, %s246, %s235
        $region28: #{tpu_custom_call.1} parent=15 // pred_fallthru
          _
      $region16: #{tpu_custom_call.1} parent=5 // pred_fallthru
        _
      %p249 = scmp.le.s32.totalorder 1, %s18
      %p250 = scmp.lt.s32.totalorder %s18, 4
      %p251 = pnand %p249, %p250
      %p252 = pneg %p251
      // Predicated region
      $region29: #{tpu_custom_call.1} parent=5 // pred_check
        _
      $region30: #{tpu_custom_call.1} parent=5 // pred_check_branch
        %254 = sbr.rel (%p251) target = $region32
      $region31: #{tpu_custom_call.1} parent=5 // pred_region
        %s255 = ssub.s32 %s18, 1
        %s256 = sand.u32 %s61, 1
        %s257 = scalar_lea.sflag [#allocation4], %s256
        %s258 = sand.u32 %s61, 1
        %s259 = smul.addr %s258, 16
        %s260 = scalar_lea.vmem [#allocation3], %s259
        // Predicated region
        $region33: #{tpu_custom_call.1} parent=31 // pred_check
          %p261 = pneg %p74
        $region34: #{tpu_custom_call.1} parent=31 // pred_check_branch
          %263 = sbr.rel (%p261) target = $region36
        $region35: #{tpu_custom_call.1} parent=31 // pred_region
          %265 = dma.done %s257, 256
        $region36: #{tpu_custom_call.1} parent=31 // pred_fallthru
          _
        %s266 = sand.u32 %s23, 1
        %s267 = scalar_lea.sflag [#allocation7], %s266
        %s268 = sand.u32 %s91, 1
        %s269 = smul.addr %s268, 32
        %s270 = scalar_lea.vmem [#allocation6], %s269
        // Predicated region
        $region37: #{tpu_custom_call.1} parent=31 // pred_check
          %p271 = pneg %p104
        $region38: #{tpu_custom_call.1} parent=31 // pred_check_branch
          %273 = sbr.rel (%p271) target = $region40
        $region39: #{tpu_custom_call.1} parent=31 // pred_region
          %275 = dma.done %s267, 512
        $region40: #{tpu_custom_call.1} parent=31 // pred_fallthru
          _
        %s276 = sand.u32 %s23, 1
        %s277 = scalar_lea.sflag [#allocation7], %s276
        %s278 = sand.u32 %s119, 1
        %s279 = scalar_lea.vmem [#allocation8], %s278
        // Predicated region
        $region41: #{tpu_custom_call.1} parent=31 // pred_check
          %p280 = pneg %p132
        $region42: #{tpu_custom_call.1} parent=31 // pred_check_branch
          %282 = sbr.rel (%p280) target = $region44
        $region43: #{tpu_custom_call.1} parent=31 // pred_region
          %284 = dma.done %s277, 16
        $region44: #{tpu_custom_call.1} parent=31 // pred_fallthru
          _
        %s285 = sand.u32 %s61, 1
        %s286 = scalar_lea.sflag [#allocation4], %s285
        %s287 = sand.u32 %s61, 1
        %s288 = smul.addr %s287, 16
        %s289 = scalar_lea.vmem [#allocation3], %s288
        %p290 = pneg %p74
        %p291 = pneg %p71
        %s292 = sand.u32 %s23, 1
        %s293 = scalar_lea.sflag [#allocation7], %s292
        %s294 = sand.u32 %s91, 1
        %s295 = smul.addr %s294, 32
        %s296 = scalar_lea.vmem [#allocation6], %s295
        %p297 = pneg %p104
        %p298 = pneg %p101
        %s299 = sand.u32 %s23, 1
        %s300 = scalar_lea.sflag [#allocation7], %s299
        %s301 = sand.u32 %s119, 1
        %s302 = scalar_lea.vmem [#allocation8], %s301
        %p303 = pneg %p132
        %p304 = pneg %p129
        %p305 = pneg %p162
        %p306 = pneg %p159
        %s307 = sand.u32 %s149, 1
        %s308 = scalar_lea.sflag [#allocation5], %s307
        %s309 = sand.u32 %s149, 1
        %s310 = smul.addr %s309, 16
        %s311 = scalar_lea.vmem [#allocation9], %s310
        %s312 = smul.u32 2, %s30
        %s313 = smul.u32 4, %s32
        %s314 = smul.u32 2, %s30
        %p315 = scmp.eq.s32.totalorder %s32, 0
        // Predicated region
        $region45: #{tpu_custom_call.1} parent=31 // pred_check
          %p316 = pneg %p315
        $region46: #{tpu_custom_call.1} parent=31 // pred_check_branch
          %318 = sbr.rel (%p316) target = $region48
        $region47: #{tpu_custom_call.1} parent=31 // pred_region
          %vm319 = vcmask 261120
          %320 = vst.msk [vmem:[#allocation2] sm:$0xff] %vm319, 0.0
          %321 = vst.msk [vmem:[#allocation2 + $0x8] sm:$0xff] %vm319, 0.0
        $region48: #{tpu_custom_call.1} parent=31 // pred_fallthru
          _
        %v322 = vld [vmem:[#allocation2] sm:$0xff]
        %v323 = vld [vmem:[#allocation2 + $0x8] sm:$0xff]
        %v324 = vld [vmem:[%s260] sm:$0xff]
        %v325 = vld [vmem:[%s260 + $0x8] sm:$0xff]
        %v326 = vld [vmem:[%s270] sm:$0xff]
        %v327 = vld [vmem:[%s270 + $0x8] sm:$0xff]
        %v328 = vld [vmem:[%s270 + $0x10] sm:$0xff]
        %v329 = vld [vmem:[%s270 + $0x18] sm:$0xff]
        %vm330 = vcmask 261120
        %v332 = vsel %vm330, %v324, 0
        %v335 = vsel %vm330, %v325, 0
        %337 = vmatpush.msra.mxu0 0.0
        %338 = vmatpush.msra.mxu0 0.0
        %339 = vmatpush.msra.mxu0 0.0
        %340 = vmatpush.msra.mxu0 0.0
        %341 = vmatpush.msra.mxu0 0.0
        %342 = vmatpush.msra.mxu0 0.0
        %343 = vmatpush.msra.mxu0 0.0
        %344 = vmatpush.msra.mxu0 0.0
        %345 = vmatpush.msra.mxu0 0.0
        %346 = vmatpush.msra.mxu0 0.0
        %347 = vmatpush.msra.mxu0 0.0
        %348 = vmatpush.msra.mxu0 0.0
        %349 = vmatpush.msra.mxu0 %v329
        %350 = vmatpush.msra.mxu0 %v328
        %351 = vmatpush.msra.mxu0 %v327
        %352 = vmatpush.msra.mxu0 %v326
        %353 = vmatmul.f32.gmra.mxu0 %v332
        %v354 = vpop.f32.mrf.mxu0
        %v355 = vadd.f32 0.0, %v354
        %356 = vmatmul.f32.gmra.mxu0 %v335
        %v357 = vpop.f32.mrf.mxu0
        %v358 = vadd.f32 0.0, %v357
        %359 = vdwg.mxu0
        %v360 = vadd.f32 %v322, %v355
        %v361 = vadd.f32 %v323, %v358
        %362 = vst.msk [vmem:[#allocation2] sm:$0xff] %vm330, %v360
        %363 = vst.msk [vmem:[#allocation2 + $0x8] sm:$0xff] %vm330, %v361
        // Predicated region
        $region49: #{tpu_custom_call.1} parent=31 // pred_check
          %p364 = pneg %p315
        $region50: #{tpu_custom_call.1} parent=31 // pred_check_branch
          %366 = sbr.rel (%p364) target = $region52
        $region51: #{tpu_custom_call.1} parent=31 // pred_region
          %v367 = vld [vmem:[#allocation2] sm:$0xff]
          %v368 = vld [vmem:[#allocation2 + $0x8] sm:$0xff]
          %v369 = vld [vmem:[%s279] sm:$0x1]
          %v371 = vperm.slane %v369, 0
          %v373 = vadd.f32 %v367, %v371
          %v374 = vadd.f32 %v368, %v371
          %375 = vst.msk [vmem:[%s311] sm:$0xff] %vm330, %v373
          %376 = vst.msk [vmem:[%s311 + $0x8] sm:$0xff] %vm330, %v374
        $region52: #{tpu_custom_call.1} parent=31 // pred_fallthru
          _
        %s377 = sand.u32 %s149, 1
        %s378 = scalar_lea.sflag [#allocation5], %s377
        %s379 = sand.u32 %s149, 1
        %s380 = smul.addr %s379, 16
        %s381 = scalar_lea.vmem [#allocation9], %s380
        // Predicated region
        $region53: #{tpu_custom_call.1} parent=31 // pred_check
          %p382 = pneg %p159
        $region54: #{tpu_custom_call.1} parent=31 // pred_check_branch
          %384 = sbr.rel (%p382) target = $region56
        $region55: #{tpu_custom_call.1} parent=31 // pred_region
          %s385 = smul.u32 2, %s30
          %387 = vsyncadd %s378, 0
          %s388 = sadd.s32 %s31, %s385
          %s389 = smul.addr %s29, 2
          %s390 = sadd.s32 %s388, %s389
          %s391 = smul.addr %s390, 8
          %s392 = scalar_lea.hbm %s3, %s391
          %s393 = sshll.u32 %s381, 4
          %s394 = int_to_ptr.vmem [resolvable:$true] %s393
          %s395 = sshll.u32 %s392, 4
          %s396 = int_to_ptr.hbm [resolvable:$true] %s395
          %401 = dma.vmem_to_hbm [thread:$0]  %s394, 256, %s396, %s378, 128, 128, 8
        $region56: #{tpu_custom_call.1} parent=31 // pred_fallthru
          _
      $region32: #{tpu_custom_call.1} parent=5 // pred_fallthru
        _
      %p402 = scmp.le.s32.totalorder 2, %s18
      // Predicated region
      $region57: #{tpu_custom_call.1} parent=5 // pred_check
        %p403 = pneg %p402
      $region58: #{tpu_custom_call.1} parent=5 // pred_check_branch
        %405 = sbr.rel (%p403) target = $region60
      $region59: #{tpu_custom_call.1} parent=5 // pred_region
        %s406 = ssub.s32 %s18, 2
        // Predicated region
        $region61: #{tpu_custom_call.1} parent=59 // pred_check
          %p407 = pneg %p165
        $region62: #{tpu_custom_call.1} parent=59 // pred_check_branch
          %409 = sbr.rel (%p407) target = $region64
        $region63: #{tpu_custom_call.1} parent=59 // pred_region
          %s410 = sand.u32 %s150, 1
          %s411 = scalar_lea.sflag [#allocation5], %s410
          %s412 = sand.u32 %s150, 1
          %s413 = smul.addr %s412, 16
          %s414 = scalar_lea.vmem [#allocation9], %s413
          %416 = dma.done %s411, 256
        $region64: #{tpu_custom_call.1} parent=59 // pred_fallthru
          _
      $region60: #{tpu_custom_call.1} parent=5 // pred_fallthru
        _
    $region6: #{tpu_custom_call.1} parent=1 // loop_footer
      %s22 = sadd.s32 1, %s18
    $region7: #{tpu_custom_call.1} parent=1 // loop_footer_branch
      %17 = sbr.rel target = $region3
    $region8: #{tpu_custom_call.1} parent=1 // loop_exit
      _
    %417 = vsyncpa [#allocation4], 1
    %s418 = scalar_lea.sflag [#allocation4], 1
    %419 = vsyncpa %s418, 1
    %420 = vsyncpa [#allocation7], 1
    %s421 = scalar_lea.sflag [#allocation7], 1
    %422 = vsyncpa %s421, 1
    %423 = vsyncpa [#allocation5], 1
    %s424 = scalar_lea.sflag [#allocation5], 1
    %425 = vsyncpa %s424, 1

</llo_original>
